<compile_context>
chip_gen: v7x
topology: tpu7x:2x2x1
jax: 0.10.0
libtpu: 0.0.40
codegen_flags: <defaults>
</compile_context>

<pallas_src>
import functools

import jax
import jax.numpy as jnp
import numpy as np
from jax.experimental import pallas as pl
from jax.experimental.pallas import tpu as pltpu


def _aggregate_kernel(gamma_ref, fq_ref, v_ref, attn_ref, *rest,
                      heads, has_proj):
    """One (batch, q_tile) grid step.

    gamma_ref: (1,) f32 SMEM scalar
    fq_ref   : (1, TQ, C)          residual slice of fmap (query-major)
    v_ref    : (1, H, N, D) bf16   value tensor for this batch (block index is
                                   constant across q tiles -> fetched per batch)
    attn_ref : (1, H, TQ, N) bf16  attention rows for this (batch, q_tile)
    wpt_ref  : (inner, C) bf16     transposed projection weight (only if has_proj)
    o_ref    : (1, TQ, C)
    """
    if has_proj:
        wpt_ref, o_ref = rest
    else:
        (o_ref,) = rest

    # Per-head aggregation, statically unrolled (heads is small for GMA).
    #   agg_h[i, d] = sum_j attn[h, i, j] * v[h, j, d]
    # Plain (M,K)@(K,N): K = N sits on the lanes of attn and the sublanes of v,
    # so Mosaic needs no operand transposes.
    per_head = []
    for h in range(heads):
        a_h = attn_ref[0, h]                       # (TQ, N) bf16
        v_h = v_ref[0, h]                          # (N, D)  bf16
        per_head.append(
            jnp.dot(a_h, v_h, preferred_element_type=jnp.float32))   # (TQ, D)
    # The PyTorch rearrange 'b h (x y) d -> b (h d) x y' is exactly head-major
    # concatenation along the channel axis.
    agg = per_head[0] if heads == 1 else jnp.concatenate(per_head, axis=-1)

    if has_proj:
        # Deferred projection: one K=inner matmul per tile (full MXU depth).
        proj = jnp.dot(agg.astype(jnp.bfloat16), wpt_ref[...],
                       preferred_element_type=jnp.float32)           # (TQ, C)
    else:
        proj = agg                                                   # inner == C

    res = fq_ref[0].astype(jnp.float32)
    o_ref[0] = (res + gamma_ref[0] * proj).astype(o_ref.dtype)


def _plan_tiles(n, heads, attn_budget_bytes=8 << 20):
    """Pick (n_pad, tq): full N when small, otherwise 128-multiple tiles with
    the bf16 attn block of (heads, tq, n_pad) held under a per-buffer budget."""
    if n <= 512:
        return n, n
    n_pad = -(-n // 128) * 128          # round up to a lane multiple
    tq = 128
    for cand in (512, 256, 128):
        if n_pad % cand == 0 and heads * cand * n_pad * 2 <= attn_budget_bytes:
            tq = cand
            break
    return n_pad, tq


def aggregate_pallas(attn, fmap, wv, wp, gamma, heads, dim_head):
    """attn: (b, heads, N, N); fmap: (b, c, h, w) NCHW; wv: (inner, c);
    wp: (c, inner) or None (when dim == inner_dim); gamma: scalar."""
    b, c, hh_, ww_ = fmap.shape
    n = hh_ * ww_
    inner = heads * dim_head
    assert attn.shape == (b, heads, n, n)
    assert wv.shape == (inner, c)
    has_proj = wp is not None
    if has_proj:
        assert wp.shape == (c, inner)
    else:
        assert inner == c

    fmap_cn = fmap.reshape(b, c, n)                                   # (b, C, N)

    # v = to_v(fmap), computed once by XLA, laid out (b, H, N, D) so the
    # in-kernel attention matmul is an untransposed (TQ,N)@(N,D).
    wv_hdc = wv.reshape(heads, dim_head, c)
    v_bhnd = jnp.einsum('hdc,bcn->bhnd', wv_hdc, fmap_cn).astype(jnp.bfloat16)

    # Dominant HBM stream -> bf16 (halves attn bytes and its VMEM blocks).
    # TODO(synk): on v7x the MXU also accepts fp8 (e4m3); softmax probs are in
    # [0,1], so a further 2x on the attn stream is available there.
    attn_bf = attn.astype(jnp.bfloat16)

    # Residual / output in query-major (b, N, C); tiny transpose done by XLA.
    fmap_nc = jnp.swapaxes(fmap_cn, 1, 2)

    n_pad, tq = _plan_tiles(n, heads)
    num_q = n_pad // tq
    if n_pad != n:
        pad = n_pad - n
        # Zero-padded key columns contribute nothing; padded query rows are
        # sliced off after the call.
        attn_bf = jnp.pad(attn_bf, ((0, 0), (0, 0), (0, pad), (0, pad)))
        v_bhnd = jnp.pad(v_bhnd, ((0, 0), (0, 0), (0, pad), (0, 0)))
        fmap_nc = jnp.pad(fmap_nc, ((0, 0), (0, pad), (0, 0)))

    gamma_arr = jnp.asarray(gamma, jnp.float32).reshape(1)

    in_specs = [
        pl.BlockSpec(memory_space=pltpu.MemorySpace.SMEM),             # gamma
        pl.BlockSpec((1, tq, c), lambda bi, qi: (bi, qi, 0)),          # residual
        pl.BlockSpec((1, heads, n_pad, dim_head),
                     lambda bi, qi: (bi, 0, 0, 0)),                    # v (per batch)
        pl.BlockSpec((1, heads, tq, n_pad),
                     lambda bi, qi: (bi, 0, qi, 0)),                   # attn
    ]
    args = [gamma_arr, fmap_nc, v_bhnd, attn_bf]
    if has_proj:
        in_specs.append(pl.BlockSpec((inner, c), lambda bi, qi: (0, 0)))
        args.append(jnp.transpose(wp).astype(jnp.bfloat16))            # (inner, C)

    # Explicit VMEM budget from actual block sizes (double-buffered inputs +
    # output) -- v5e's scoped default is only 16 MiB.
    itemsize = jnp.dtype(fmap.dtype).itemsize
    blk_bytes = (heads * tq * n_pad * 2            # attn
                 + heads * n_pad * dim_head * 2    # v
                 + tq * c * itemsize               # residual
                 + tq * c * itemsize               # output
                 + (inner * c * 2 if has_proj else 0))
    vmem_limit = int(min(max(2 * blk_bytes + (4 << 20), 32 << 20), 100 << 20))

    # TODO(synk): on v7x, mark the batch/q axis CORE_PARALLEL (or shard via
    # core_map) so both TensorCores are used; plain "parallel" is kept here
    # for portability across v5e/v6e.
    out_nc = pl.pallas_call(
        functools.partial(_aggregate_kernel, heads=heads, has_proj=has_proj),
        out_shape=jax.ShapeDtypeStruct((b, n_pad, c), fmap.dtype),
        grid=(b, num_q),
        in_specs=in_specs,
        out_specs=pl.BlockSpec((1, tq, c), lambda bi, qi: (bi, qi, 0)),
        compiler_params=pltpu.CompilerParams(
            dimension_semantics=("parallel", "parallel"),
            vmem_limit_bytes=vmem_limit),
    )(*args)

    if n_pad != n:
        out_nc = out_nc[:, :n, :]
    return jnp.swapaxes(out_nc, 1, 2).reshape(b, c, hh_, ww_)


def aggregate_reference(attn, fmap, wv, wp, gamma, heads, dim_head):
    """Pure-JAX f32 reference mirroring the PyTorch forward exactly."""
    b, c, h, w = fmap.shape
    n = h * w
    inner = heads * dim_head
    fmap_cn = fmap.reshape(b, c, n)                                   # (b, c, N)
    v = jnp.einsum('oc,bcn->bon', wv, fmap_cn)                        # (b, inner, N)
    v = v.reshape(b, heads, dim_head, n).transpose(0, 1, 3, 2)        # (b, H, N, D)
    out = jnp.einsum('bhij,bhjd->bhid', attn, v)                      # (b, H, N, D)
    out = out.transpose(0, 1, 3, 2).reshape(b, inner, n)              # (b, inner, N)
    if wp is not None:
        out = jnp.einsum('oc,bcn->bon', wp, out)                      # (b, c, N)
    out = out.reshape(b, -1, h, w)
    return fmap + gamma * out


if __name__ == "__main__":
    def run_case(key, b, dim, hh, ww, heads, dim_head, use_project):
        inner = heads * dim_head
        n = hh * ww
        k1, k2, k3, k4 = jax.random.split(key, 4)
        fmap = jax.random.normal(k1, (b, dim, hh, ww), dtype=jnp.float32)
        attn = jax.nn.softmax(
            jax.random.normal(k2, (b, heads, n, n), dtype=jnp.float32), axis=-1)
        # Conv 1x1 weights squeezed to 2-D (out_ch, in_ch). Nonzero gamma so
        # the aggregation path is actually exercised (PyTorch init is zeros).
        wv = 0.2 * jax.random.normal(k3, (inner, dim), dtype=jnp.float32)
        wp = (0.2 * jax.random.normal(k4, (dim, inner), dtype=jnp.float32)
              if use_project else None)
        gamma = jnp.float32(0.5)

        out = aggregate_pallas(attn, fmap, wv, wp, gamma, heads, dim_head)
        out = jax.block_until_ready(out)
        ref = aggregate_reference(attn, fmap, wv, wp, gamma, heads, dim_head)
        # bf16 matmul inputs with f32 accumulation -> loosened tolerance.
        np.testing.assert_allclose(np.asarray(out), np.asarray(ref),
                                   rtol=2e-2, atol=2e-2)

    key = jax.random.PRNGKey(0)
    k1, k2 = jax.random.split(key)
    # dim != inner_dim -> projection conv path.
    run_case(k1, b=2, dim=16, hh=8, ww=8, heads=2, dim_head=32, use_project=True)
    # dim == inner_dim -> identity (no projection) path.
    run_case(k2, b=2, dim=64, hh=8, ww=8, heads=2, dim_head=32, use_project=False)
    print("KERNEL_OK")
</pallas_src>

<mosaic_0001>
module attributes {stable_mosaic.version = 11 : i64} {
  func.func @_aggregate_kernel(%arg0: i32, %arg1: i32, %arg2: memref<1xf32, #tpu.memory_space<smem>>, %arg3: memref<1x64x16xf32, #tpu.memory_space<vmem>>, %arg4: memref<1x2x64x32xbf16, #tpu.memory_space<vmem>>, %arg5: memref<1x2x64x64xbf16, #tpu.memory_space<vmem>>, %arg6: memref<64x16xbf16, #tpu.memory_space<vmem>>, %arg7: memref<1x64x16xf32, #tpu.memory_space<vmem>>) attributes {dimension_semantics = [#tpu.dimension_semantics<parallel>, #tpu.dimension_semantics<parallel>], iteration_bounds = array<i64: 2, 1>, scalar_prefetch = 0 : i64, scratch_operands = 0 : i64, tpu.core_type = #tpu.core_type<tc>, window_params = [{transform_indices = @transform_0, window_bounds = array<i64: 1>}, {transform_indices = @transform_1, window_bounds = array<i64: 1, 64, 16>}, {transform_indices = @transform_2, window_bounds = array<i64: 1, 2, 64, 32>}, {transform_indices = @transform_3, window_bounds = array<i64: 1, 2, 64, 64>}, {pipeline_mode = #tpu.pipeline_mode<synchronous>, transform_indices = @transform_4, window_bounds = array<i64: 64, 16>}, {transform_indices = @transform_5, window_bounds = array<i64: 1, 64, 16>}]} {
    %c0 = arith.constant 0 : index
    %c0_0 = arith.constant 0 : index
    %c0_1 = arith.constant 0 : index
    %c0_2 = arith.constant 0 : index
    %0 = vector.load %arg5[%c0, %c0_0, %c0_1, %c0_2] : memref<1x2x64x64xbf16, #tpu.memory_space<vmem>>, vector<1x1x64x64xbf16>
    %1 = vector.shape_cast %0 : vector<1x1x64x64xbf16> to vector<64x64xbf16>
    %c0_3 = arith.constant 0 : index
    %c0_4 = arith.constant 0 : index
    %c0_5 = arith.constant 0 : index
    %c0_6 = arith.constant 0 : index
    %2 = vector.load %arg4[%c0_3, %c0_4, %c0_5, %c0_6] : memref<1x2x64x32xbf16, #tpu.memory_space<vmem>>, vector<1x1x64x32xbf16>
    %3 = vector.shape_cast %2 : vector<1x1x64x32xbf16> to vector<64x32xbf16>
    %cst = arith.constant dense<0.000000e+00> : vector<64x32xf32>
    %4 = tpu.matmul %1, %3, %cst {dimension_numbers = #tpu.dot_dimension_numbers<[1], [0], [0], [1], [0, 0, 1, 1], [], []>} : vector<64x64xbf16>, vector<64x32xbf16>, vector<64x32xf32> -> vector<64x32xf32>
    %c0_7 = arith.constant 0 : index
    %c1 = arith.constant 1 : index
    %c0_8 = arith.constant 0 : index
    %c0_9 = arith.constant 0 : index
    %5 = vector.load %arg5[%c0_7, %c1, %c0_8, %c0_9] : memref<1x2x64x64xbf16, #tpu.memory_space<vmem>>, vector<1x1x64x64xbf16>
    %6 = vector.shape_cast %5 : vector<1x1x64x64xbf16> to vector<64x64xbf16>
    %c0_10 = arith.constant 0 : index
    %c1_11 = arith.constant 1 : index
    %c0_12 = arith.constant 0 : index
    %c0_13 = arith.constant 0 : index
    %7 = vector.load %arg4[%c0_10, %c1_11, %c0_12, %c0_13] : memref<1x2x64x32xbf16, #tpu.memory_space<vmem>>, vector<1x1x64x32xbf16>
    %8 = vector.shape_cast %7 : vector<1x1x64x32xbf16> to vector<64x32xbf16>
    %cst_14 = arith.constant dense<0.000000e+00> : vector<64x32xf32>
    %9 = tpu.matmul %6, %8, %cst_14 {dimension_numbers = #tpu.dot_dimension_numbers<[1], [0], [0], [1], [0, 0, 1, 1], [], []>} : vector<64x64xbf16>, vector<64x32xbf16>, vector<64x32xf32> -> vector<64x32xf32>
    %10 = tpu.concatenate %4, %9 in 1 : vector<64x32xf32>, vector<64x32xf32> -> vector<64x64xf32>
    %11 = arith.truncf %10 : vector<64x64xf32> to vector<64x64xbf16>
    %c0_15 = arith.constant 0 : index
    %c0_16 = arith.constant 0 : index
    %12 = vector.load %arg6[%c0_15, %c0_16] : memref<64x16xbf16, #tpu.memory_space<vmem>>, vector<64x16xbf16>
    %cst_17 = arith.constant dense<0.000000e+00> : vector<64x16xf32>
    %13 = tpu.matmul %11, %12, %cst_17 {dimension_numbers = #tpu.dot_dimension_numbers<[1], [0], [0], [1], [0, 0, 1, 1], [], []>} : vector<64x64xbf16>, vector<64x16xbf16>, vector<64x16xf32> -> vector<64x16xf32>
    %c0_18 = arith.constant 0 : index
    %c0_19 = arith.constant 0 : index
    %c0_20 = arith.constant 0 : index
    %14 = vector.load %arg3[%c0_18, %c0_19, %c0_20] : memref<1x64x16xf32, #tpu.memory_space<vmem>>, vector<1x64x16xf32>
    %15 = vector.shape_cast %14 : vector<1x64x16xf32> to vector<64x16xf32>
    %c0_21 = arith.constant 0 : index
    %16 = memref.load %arg2[%c0_21] : memref<1xf32, #tpu.memory_space<smem>>
    %17 = vector.broadcast %16 : f32 to vector<64x16xf32>
    %18 = arith.mulf %17, %13 : vector<64x16xf32>
    %19 = arith.addf %15, %18 : vector<64x16xf32>
    %c0_22 = arith.constant 0 : index
    %c0_23 = arith.constant 0 : index
    %c0_24 = arith.constant 0 : index
    %20 = vector.load %arg7[%c0_22, %c0_23, %c0_24] : memref<1x64x16xf32, #tpu.memory_space<vmem>>, vector<1x64x16xf32>
    %21 = vector.shape_cast %20 : vector<1x64x16xf32> to vector<64x16xf32>
    %22 = vector.shape_cast %19 : vector<64x16xf32> to vector<1x64x16xf32>
    tpu.vector_store %arg7[%c0_22, %c0_23, %c0_24], %22 {strides = array<i32>} : memref<1x64x16xf32, #tpu.memory_space<vmem>>, vector<1x64x16xf32>,
    return
  }
  func.func @transform_0(%arg0: i32, %arg1: i32) -> i32 {
    %c0_i32 = arith.constant 0 : i32
    %c0_i32_0 = arith.constant 0 : i32
    return %c0_i32 : i32
  }
  func.func @transform_1(%arg0: i32, %arg1: i32) -> (i32, i32, i32) {
    %c0_i32 = arith.constant 0 : i32
    %c0_i32_0 = arith.constant 0 : i32
    return %arg0, %arg1, %c0_i32 : i32, i32, i32
  }
  func.func @transform_2(%arg0: i32, %arg1: i32) -> (i32, i32, i32, i32) {
    %c0_i32 = arith.constant 0 : i32
    %c0_i32_0 = arith.constant 0 : i32
    %c0_i32_1 = arith.constant 0 : i32
    %c0_i32_2 = arith.constant 0 : i32
    return %arg0, %c0_i32, %c0_i32_0, %c0_i32_1 : i32, i32, i32, i32
  }
  func.func @transform_3(%arg0: i32, %arg1: i32) -> (i32, i32, i32, i32) {
    %c0_i32 = arith.constant 0 : i32
    %c0_i32_0 = arith.constant 0 : i32
    %c0_i32_1 = arith.constant 0 : i32
    return %arg0, %c0_i32, %arg1, %c0_i32_0 : i32, i32, i32, i32
  }
  func.func @transform_4(%arg0: i32, %arg1: i32) -> (i32, i32) {
    %c0_i32 = arith.constant 0 : i32
    %c0_i32_0 = arith.constant 0 : i32
    %c0_i32_1 = arith.constant 0 : i32
    return %c0_i32, %c0_i32_0 : i32, i32
  }
  func.func @transform_5(%arg0: i32, %arg1: i32) -> (i32, i32, i32) {
    %c0_i32 = arith.constant 0 : i32
    %c0_i32_0 = arith.constant 0 : i32
    return %arg0, %arg1, %c0_i32 : i32, i32, i32
  }
}

</mosaic_0001>

<llo_original>
// kernel: tpu_custom_call.1
$region0: #{tpu_custom_call.1}
  #allocation0 [shape = 'u32[]', space=smem, size = 0x4, offset = 0x4, fixed_abs, tag = 'smem constant byte address 0x4 - core index']
  #allocation1 [shape = 'u32[144,128]{1,0:T(1,128)}', space=vmem, size = 0x12000, scoped, tag = 'internal scratch']
  #allocation2 [shape = 'f32[1]{0:T(128)S(6)}', space=smem, size = 0x200, scoped, tag = 'scoped memory for tpu_custom_call.1']
  %s0 = inlined_call_operand.<no memory space> [shape: f32[1], index: 0, kind: input, shape index: {}]
  %s1 = inlined_call_operand.vmem [shape: f32[2,64,16], index: 1, kind: input, shape index: {}]
  %s2 = inlined_call_operand.vmem [shape: bf16[2,2,64,32], index: 2, kind: input, shape index: {}]
  %s3 = inlined_call_operand.vmem [shape: bf16[2,2,64,64], index: 3, kind: input, shape index: {}]
  %s4 = inlined_call_operand.vmem [shape: bf16[64,16], index: 4, kind: input, shape index: {}]
  %s5 = inlined_call_operand.vmem [shape: f32[2,64,16], index: 5, kind: output, shape index: {}]
  %s6 = sld [smem:[#allocation0]]
  $region53: #{tpu_custom_call.1} parent=0
    _
  %s8 = ssub.s32 1, %s6
  %s9 = scalar_select 0, %s8, %s6
  %10 = sst [smem:[#allocation2]] %s0
  loop: start=0, step=1, limit=4
  $region2: #{tpu_custom_call.1} parent=0 // loop_pre_header
    _
  $region3: #{tpu_custom_call.1} parent=0 // loop_header
    %s12 = sphi 0, %s16
    %p13 = scmp.ge.s32.totalorder %s12, 4
    %s19 = sphi 0, %s31
    %s20 = sphi 0, %s27
    %s21 = sphi 0, %s19
    %s22 = sphi 0, %s20
    %s23 = sphi 0, %s21
    %s24 = sphi 0, %s22
    %s32 = sphi 0, %s32
    %s34 = sphi 0, %s32
    %s35 = sphi 0, %s34
    %s49 = sphi 0, %s35
    %s57 = sphi 0, %s59
    %s60 = sphi 0, %s57
    %s61 = sphi 0, %s60
    %s77 = sphi 0, %s61
    %s83 = sphi 0, %s85
    %s86 = sphi 0, %s83
    %s87 = sphi 0, %s86
    %s103 = sphi 0, %s87
    %s111 = sphi 0, %s113
    %s114 = sphi 0, %s111
    %s115 = sphi 0, %s114
    %s131 = sphi 0, %s115
    %s135 = sphi 0, %s135
    %s137 = sphi 0, %s135
    %s138 = sphi 0, %s137
    %s152 = sphi 0, %s138
    %s160 = sphi 0, %s162
    %s163 = sphi 0, %s160
    %s164 = sphi 0, %s163
    %s180 = sphi 0, %s164
  $region4: #{tpu_custom_call.1} parent=0 // loop_header_branch
    %15 = sbr.rel (%p13) target = $region8
  $region5: #{tpu_custom_call.1} parent=0 // loop_body
    %s17 = ssub.s32 %s12, 1
    %s18 = ssub.s32 %s12, 2
    %s25 = sadd.s32 1, %s20
    %p26 = scmp.ge.s32.totalorder %s25, 1
    %s27 = scalar_select %p26, 0, %s25
    %s28 = sadd.s32 1, %s19
    %s29 = scalar_select %p26, %s28, %s19
    %p30 = scmp.ge.s32.totalorder %s29, 2
    %s31 = scalar_select %p30, 0, %s29
    %s33 = sadd.s32 %s32, 1
    %p36 = scmp.eq.s32.totalorder %s12, 1
    %p37 = scmp.ne.s32.totalorder %s32, %s34
    %p38 = scmp.eq.s32.totalorder %s12, 0
    %p39 = por %p37, %p38
    %p40 = scmp.ne.s32.totalorder %s32, %s34
    %p41 = scmp.eq.s32.totalorder %s17, 1
    %p42 = por %p40, %p41
    %p43 = scmp.ne.s32.totalorder %s34, %s35
    %p44 = scmp.eq.s32.totalorder %s17, 0
    %p45 = por %p43, %p44
    %p46 = scmp.ne.s32.totalorder %s34, %s35
    %p47 = scmp.eq.s32.totalorder %s18, 1
    %p48 = por %p46, %p47
    %p50 = scmp.ne.s32.totalorder %s35, %s49
    %p51 = scmp.eq.s32.totalorder %s18, 0
    %p52 = por %p50, %p51
    %s53 = ssub.s32 %s19, %s31
    %s54 = ssub.s32 %s20, %s27
    %s55 = sor.u32 %s53, %s54
    %p56 = scmp.eq.s32.totalorder %s55, 0
    %s58 = sadd.s32 %s57, 1
    %s59 = scalar_select %p56, %s57, %s58
    %p62 = pneg %p56
    %p63 = scmp.eq.s32.totalorder %s12, 1
    %p64 = por %p62, %p63
    %p65 = scmp.ne.s32.totalorder %s57, %s60
    %p66 = scmp.eq.s32.totalorder %s12, 0
    %p67 = por %p65, %p66
    %p68 = scmp.ne.s32.totalorder %s57, %s60
    %p69 = scmp.eq.s32.totalorder %s17, 1
    %p70 = por %p68, %p69
    %p71 = scmp.ne.s32.totalorder %s60, %s61
    %p72 = scmp.eq.s32.totalorder %s17, 0
    %p73 = por %p71, %p72
    %p74 = scmp.ne.s32.totalorder %s60, %s61
    %p75 = scmp.eq.s32.totalorder %s18, 1
    %p76 = por %p74, %p75
    %p78 = scmp.ne.s32.totalorder %s61, %s77
    %p79 = scmp.eq.s32.totalorder %s18, 0
    %p80 = por %p78, %p79
    %s81 = ssub.s32 %s19, %s31
    %p82 = scmp.eq.s32.totalorder %s81, 0
    %s84 = sadd.s32 %s83, 1
    %s85 = scalar_select %p82, %s83, %s84
    %p88 = pneg %p82
    %p89 = scmp.eq.s32.totalorder %s12, 1
    %p90 = por %p88, %p89
    %p91 = scmp.ne.s32.totalorder %s83, %s86
    %p92 = scmp.eq.s32.totalorder %s12, 0
    %p93 = por %p91, %p92
    %p94 = scmp.ne.s32.totalorder %s83, %s86
    %p95 = scmp.eq.s32.totalorder %s17, 1
    %p96 = por %p94, %p95
    %p97 = scmp.ne.s32.totalorder %s86, %s87
    %p98 = scmp.eq.s32.totalorder %s17, 0
    %p99 = por %p97, %p98
    %p100 = scmp.ne.s32.totalorder %s86, %s87
    %p101 = scmp.eq.s32.totalorder %s18, 1
    %p102 = por %p100, %p101
    %p104 = scmp.ne.s32.totalorder %s87, %s103
    %p105 = scmp.eq.s32.totalorder %s18, 0
    %p106 = por %p104, %p105
    %s107 = ssub.s32 %s19, %s31
    %s108 = ssub.s32 %s20, %s27
    %s109 = sor.u32 %s107, %s108
    %p110 = scmp.eq.s32.totalorder %s109, 0
    %s112 = sadd.s32 %s111, 1
    %s113 = scalar_select %p110, %s111, %s112
    %p116 = pneg %p110
    %p117 = scmp.eq.s32.totalorder %s12, 1
    %p118 = por %p116, %p117
    %p119 = scmp.ne.s32.totalorder %s111, %s114
    %p120 = scmp.eq.s32.totalorder %s12, 0
    %p121 = por %p119, %p120
    %p122 = scmp.ne.s32.totalorder %s111, %s114
    %p123 = scmp.eq.s32.totalorder %s17, 1
    %p124 = por %p122, %p123
    %p125 = scmp.ne.s32.totalorder %s114, %s115
    %p126 = scmp.eq.s32.totalorder %s17, 0
    %p127 = por %p125, %p126
    %p128 = scmp.ne.s32.totalorder %s114, %s115
    %p129 = scmp.eq.s32.totalorder %s18, 1
    %p130 = por %p128, %p129
    %p132 = scmp.ne.s32.totalorder %s115, %s131
    %p133 = scmp.eq.s32.totalorder %s18, 0
    %p134 = por %p132, %p133
    %s136 = sadd.s32 %s135, 1
    %p139 = scmp.eq.s32.totalorder %s12, 1
    %p140 = scmp.ne.s32.totalorder %s135, %s137
    %p141 = scmp.eq.s32.totalorder %s12, 0
    %p142 = por %p140, %p141
    %p143 = scmp.ne.s32.totalorder %s135, %s137
    %p144 = scmp.eq.s32.totalorder %s17, 1
    %p145 = por %p143, %p144
    %p146 = scmp.ne.s32.totalorder %s137, %s138
    %p147 = scmp.eq.s32.totalorder %s17, 0
    %p148 = por %p146, %p147
    %p149 = scmp.ne.s32.totalorder %s137, %s138
    %p150 = scmp.eq.s32.totalorder %s18, 1
    %p151 = por %p149, %p150
    %p153 = scmp.ne.s32.totalorder %s138, %s152
    %p154 = scmp.eq.s32.totalorder %s18, 0
    %p155 = por %p153, %p154
    %s156 = ssub.s32 %s19, %s31
    %s157 = ssub.s32 %s20, %s27
    %s158 = sor.u32 %s156, %s157
    %p159 = scmp.eq.s32.totalorder %s158, 0
    %s161 = sadd.s32 %s160, 1
    %s162 = scalar_select %p159, %s160, %s161
    %p165 = pneg %p159
    %p166 = scmp.eq.s32.totalorder %s12, 1
    %p167 = por %p165, %p166
    %p168 = scmp.ne.s32.totalorder %s160, %s163
    %p169 = scmp.eq.s32.totalorder %s12, 0
    %p170 = por %p168, %p169
    %p171 = scmp.ne.s32.totalorder %s160, %s163
    %p172 = scmp.eq.s32.totalorder %s17, 1
    %p173 = por %p171, %p172
    %p174 = scmp.ne.s32.totalorder %s163, %s164
    %p175 = scmp.eq.s32.totalorder %s17, 0
    %p176 = por %p174, %p175
    %p177 = scmp.ne.s32.totalorder %s163, %s164
    %p178 = scmp.eq.s32.totalorder %s18, 1
    %p179 = por %p177, %p178
    %p181 = scmp.ne.s32.totalorder %s164, %s180
    %p182 = scmp.eq.s32.totalorder %s18, 0
    %p183 = por %p181, %p182
    %p184 = scmp.le.s32.totalorder 1, %s12
    %p185 = scmp.lt.s32.totalorder %s12, 3
    %p186 = pnand %p184, %p185
    %p187 = pneg %p186
    // Predicated region
    $region9: #{tpu_custom_call.1} parent=5 // pred_check
      _
    $region10: #{tpu_custom_call.1} parent=5 // pred_check_branch
      %189 = sbr.rel (%p186) target = $region12
    $region11: #{tpu_custom_call.1} parent=5 // pred_region
      %s190 = ssub.s32 %s12, 1
      // Predicated region
      $region13: #{tpu_custom_call.1} parent=11 // pred_check
        %p191 = pneg %p45
      $region14: #{tpu_custom_call.1} parent=11 // pred_check_branch
        %193 = sbr.rel (%p191) target = $region16
      $region15: #{tpu_custom_call.1} parent=11 // pred_region
        _
      $region16: #{tpu_custom_call.1} parent=11 // pred_fallthru
        _
      // Predicated region
      $region17: #{tpu_custom_call.1} parent=11 // pred_check
        %p194 = pneg %p148
      $region18: #{tpu_custom_call.1} parent=11 // pred_check_branch
        %196 = sbr.rel (%p194) target = $region20
      $region19: #{tpu_custom_call.1} parent=11 // pred_region
        _
      $region20: #{tpu_custom_call.1} parent=11 // pred_fallthru
        _
    $region12: #{tpu_custom_call.1} parent=5 // pred_fallthru
      _
    %p197 = scmp.lt.s32.totalorder %s12, 2
    // Predicated region
    $region21: #{tpu_custom_call.1} parent=5 // pred_check
      %p198 = pneg %p197
    $region22: #{tpu_custom_call.1} parent=5 // pred_check_branch
      %200 = sbr.rel (%p198) target = $region24
    $region23: #{tpu_custom_call.1} parent=5 // pred_region
      // Predicated region
      $region25: #{tpu_custom_call.1} parent=23 // pred_check
        %p201 = pneg %p67
      $region26: #{tpu_custom_call.1} parent=23 // pred_check_branch
        %203 = sbr.rel (%p201) target = $region28
      $region27: #{tpu_custom_call.1} parent=23 // pred_region
        %s204 = smul.u32 8, %s20
        %p205 = scmp.lt.s32.totalorder %s19, 1
        %s206 = scalar_select %p205, %s19, 1
        %p207 = scmp.lt.s32.totalorder %s204, 7
        %s208 = scalar_select %p207, %s204, 7
        %s209 = smul.addr %s206, 8
        %s210 = sadd.s32 %s208, %s209
        %s211 = smul.addr %s210, 8
        %s212 = scalar_lea.vmem %s1, %s211
        %s213 = smul.u32 8, %s20
      $region28: #{tpu_custom_call.1} parent=23 // pred_fallthru
        _
      // Predicated region
      $region29: #{tpu_custom_call.1} parent=23 // pred_check
        %p214 = pneg %p93
      $region30: #{tpu_custom_call.1} parent=23 // pred_check_branch
        %216 = sbr.rel (%p214) target = $region32
      $region31: #{tpu_custom_call.1} parent=23 // pred_region
        %p217 = scmp.lt.s32.totalorder %s19, 1
        %s218 = scalar_select %p217, %s19, 1
        %s219 = smul.addr %s218, 16
        %s220 = smul.addr %s219, 4
        %s221 = scalar_lea.vmem %s2, %s220
      $region32: #{tpu_custom_call.1} parent=23 // pred_fallthru
        _
      // Predicated region
      $region33: #{tpu_custom_call.1} parent=23 // pred_check
        %p222 = pneg %p121
      $region34: #{tpu_custom_call.1} parent=23 // pred_check_branch
        %224 = sbr.rel (%p222) target = $region36
      $region35: #{tpu_custom_call.1} parent=23 // pred_region
        %s225 = smul.u32 8, %s20
        %p226 = scmp.lt.s32.totalorder %s19, 1
        %s227 = scalar_select %p226, %s19, 1
        %p228 = scmp.lt.s32.totalorder %s225, 7
        %s229 = scalar_select %p228, %s225, 7
        %s230 = smul.addr %s227, 16
        %s231 = sadd.s32 %s229, %s230
        %s232 = smul.addr %s231, 4
        %s233 = scalar_lea.vmem %s3, %s232
        %s234 = smul.u32 8, %s20
      $region36: #{tpu_custom_call.1} parent=23 // pred_fallthru
        _
    $region24: #{tpu_custom_call.1} parent=5 // pred_fallthru
      _
    %p235 = scmp.le.s32.totalorder 1, %s12
    %p236 = scmp.lt.s32.totalorder %s12, 3
    %p237 = pnand %p235, %p236
    %p238 = pneg %p237
    // Predicated region
    $region37: #{tpu_custom_call.1} parent=5 // pred_check
      _
    $region38: #{tpu_custom_call.1} parent=5 // pred_check_branch
      %240 = sbr.rel (%p237) target = $region40
    $region39: #{tpu_custom_call.1} parent=5 // pred_region
      %s241 = ssub.s32 %s12, 1
      %p242 = pneg %p45
      %p243 = pneg %p42
      %s244 = smul.u32 8, %s22
      %p245 = scmp.lt.s32.totalorder %s21, 1
      %s246 = scalar_select %p245, %s21, 1
      %p247 = scmp.lt.s32.totalorder %s244, 7
      %s248 = scalar_select %p247, %s244, 7
      %s249 = smul.addr %s246, 8
      %s250 = sadd.s32 %s248, %s249
      %s251 = smul.addr %s250, 8
      %s252 = scalar_lea.vmem %s1, %s251
      %p253 = pneg %p73
      %p254 = pneg %p70
      %p255 = scmp.lt.s32.totalorder %s21, 1
      %s256 = scalar_select %p255, %s21, 1
      %s257 = smul.addr %s256, 16
      %s258 = smul.addr %s257, 4
      %s259 = scalar_lea.vmem %s2, %s258
      %p260 = pneg %p99
      %p261 = pneg %p96
      %s262 = smul.u32 8, %s22
      %p263 = scmp.lt.s32.totalorder %s21, 1
      %s264 = scalar_select %p263, %s21, 1
      %p265 = scmp.lt.s32.totalorder %s262, 7
      %s266 = scalar_select %p265, %s262, 7
      %s267 = smul.addr %s264, 16
      %s268 = sadd.s32 %s266, %s267
      %s269 = smul.addr %s268, 4
      %s270 = scalar_lea.vmem %s3, %s269
      %p271 = pneg %p127
      %p272 = pneg %p124
      %p273 = pneg %p148
      %p274 = pneg %p145
      %p275 = pneg %p176
      %p276 = pneg %p173
      %s277 = smul.u32 8, %s22
      %p278 = scmp.lt.s32.totalorder %s21, 1
      %s279 = scalar_select %p278, %s21, 1
      %p280 = scmp.lt.s32.totalorder %s277, 7
      %s281 = scalar_select %p280, %s277, 7
      %s282 = smul.addr %s279, 8
      %s283 = sadd.s32 %s281, %s282
      %s284 = smul.addr %s283, 8
      %s285 = scalar_lea.vmem %s5, %s284
      %s286 = smul.u32 8, %s22
      %p287 = scmp.lt.s32.totalorder %s21, 1
      %s288 = scalar_select %p287, %s21, 1
      %p289 = scmp.lt.s32.totalorder %s286, 7
      %s290 = scalar_select %p289, %s286, 7
      %s291 = smul.addr %s288, 8
      %s292 = sadd.s32 %s290, %s291
      %s293 = smul.addr %s292, 8
      %s294 = scalar_lea.vmem %s1, %s293
      %s295 = smul.u32 8, %s22
      %p296 = scmp.lt.s32.totalorder %s21, 1
      %s297 = scalar_select %p296, %s21, 1
      %s298 = smul.addr %s297, 16
      %s299 = smul.addr %s298, 4
      %s300 = scalar_lea.vmem %s2, %s299
      %s301 = smul.u32 8, %s22
      %p302 = scmp.lt.s32.totalorder %s21, 1
      %s303 = scalar_select %p302, %s21, 1
      %p304 = scmp.lt.s32.totalorder %s301, 7
      %s305 = scalar_select %p304, %s301, 7
      %s306 = smul.addr %s303, 16
      %s307 = sadd.s32 %s305, %s306
      %s308 = smul.addr %s307, 4
      %s309 = scalar_lea.vmem %s3, %s308
      %s310 = smul.u32 8, %s22
      %s311 = smul.u32 8, %s22
      %p312 = scmp.lt.s32.totalorder %s21, 1
      %s313 = scalar_select %p312, %s21, 1
      %p314 = scmp.lt.s32.totalorder %s311, 7
      %s315 = scalar_select %p314, %s311, 7
      %s316 = smul.addr %s313, 8
      %s317 = sadd.s32 %s315, %s316
      %s318 = smul.addr %s317, 8
      %s319 = scalar_lea.vmem %s5, %s318
      %s320 = smul.u32 8, %s22
      %v322 = vld [vmem:[%s309] sm:$0xf]
      %v323 = vld [vmem:[%s309 + $0x4] sm:$0xf]
      %v324 = vld [vmem:[%s309 + $0x8] sm:$0xf]
      %v325 = vld [vmem:[%s309 + $0xc] sm:$0xf]
      %v326 = vld [vmem:[%s309 + $0x10] sm:$0xf]
      %v327 = vld [vmem:[%s309 + $0x14] sm:$0xf]
      %v328 = vld [vmem:[%s309 + $0x18] sm:$0xf]
      %v329 = vld [vmem:[%s309 + $0x1c] sm:$0xf]
      %v330 = vld [vmem:[%s300] sm:$0xf]
      %v331 = vld [vmem:[%s300 + $0x4] sm:$0xf]
      %v332 = vld [vmem:[%s300 + $0x8] sm:$0xf]
      %v333 = vld [vmem:[%s300 + $0xc] sm:$0xf]
      %v334 = vld [vmem:[%s300 + $0x10] sm:$0xf]
      %v335 = vld [vmem:[%s300 + $0x14] sm:$0xf]
      %v336 = vld [vmem:[%s300 + $0x18] sm:$0xf]
      %v337 = vld [vmem:[%s300 + $0x1c] sm:$0xf]
      %v346 = vunpack.c.l.b16 %v322
      %v347 = vunpack.c.l.b16 %v323
      %v348 = vunpack.c.l.b16 %v324
      %v349 = vunpack.c.l.b16 %v325
      %v350 = vunpack.c.l.b16 %v326
      %v351 = vunpack.c.l.b16 %v327
      %v352 = vunpack.c.l.b16 %v328
      %v353 = vunpack.c.l.b16 %v329
      %v354 = vpack.c.b16 %v347, %v346
      %v355 = vpack.c.b16 %v349, %v348
      %v356 = vpack.c.b16 %v351, %v350
      %v357 = vpack.c.b16 %v353, %v352
      %v366 = vunpack.c.l.b16 %v330
      %v367 = vunpack.c.l.b16 %v331
      %v368 = vunpack.c.l.b16 %v332
      %v369 = vunpack.c.l.b16 %v333
      %v370 = vunpack.c.l.b16 %v334
      %v371 = vunpack.c.l.b16 %v335
      %v372 = vunpack.c.l.b16 %v336
      %v373 = vunpack.c.l.b16 %v337
      %v374 = vpack.c.b16 %v367, %v366
      %v375 = vpack.c.b16 %v369, %v368
      %v376 = vpack.c.b16 %v371, %v370
      %v377 = vpack.c.b16 %v373, %v372
      %vm382 = vcmask 523264
      %v384 = vsel %vm382, %v354, 0
      %v387 = vsel %vm382, %v355, 0
      %v390 = vsel %vm382, %v356, 0
      %v393 = vsel %vm382, %v357, 0
      %395 = vmatprep.subr.bf16.mxu0 0
      %396 = vmatpush1.bf16.msra.mxu0 %v374
      %397 = vmatprep.subr.bf16.mxu0 0
      %398 = vmatpush1.bf16.msra.mxu0 %v375
      %399 = vmatprep.subr.bf16.mxu0 0
      %400 = vmatpush1.bf16.msra.mxu0 %v376
      %401 = vmatprep.subr.bf16.mxu0 0
      %402 = vmatpush1.bf16.msra.mxu0 %v377
      %403 = vmatprep.subr.bf16.mxu0 0
      %404 = vmatpush1.bf16.msra.mxu0 0
      %405 = vmatprep.subr.bf16.mxu0 0
      %406 = vmatpush1.bf16.msra.mxu0 0
      %407 = vmatprep.subr.bf16.mxu0 0
      %408 = vmatpush1.bf16.msra.mxu0 0
      %409 = vmatprep.subr.bf16.mxu0 0
      %410 = vmatpush1.bf16.msra.mxu0 0
      %411 = vmatprep.subr.bf16.mxu0 0
      %412 = vmatpush1.bf16.msra.mxu0 0
      %413 = vmatprep.subr.bf16.mxu0 0
      %414 = vmatpush1.bf16.msra.mxu0 0
      %415 = vmatprep.subr.bf16.mxu0 0
      %416 = vmatpush1.bf16.msra.mxu0 0
      %417 = vmatprep.subr.bf16.mxu0 0
      %418 = vmatpush1.bf16.msra.mxu0 0
      %419 = vmatprep.subr.bf16.mxu0 0
      %420 = vmatpush1.bf16.msra.mxu0 0
      %421 = vmatprep.subr.bf16.mxu0 0
      %422 = vmatpush1.bf16.msra.mxu0 0
      %423 = vmatprep.subr.bf16.mxu0 0
      %424 = vmatpush1.bf16.msra.mxu0 0
      %425 = vmatprep.subr.bf16.mxu0 0
      %426 = vmatpush1.bf16.msra.mxu0 0
      %427 = vmatprep.mubr.bf16.mxu0 0
      %428 = vmatmul.mubr.bf16.gmra.mrb[0].mxu0 %v384
      %v429 = vpop.f32.mrb[0].mxu0
      %v430 = vadd.f32 0.0, %v429
      %v431 = vpop.f32.mrb[0].mxu0
      %v432 = vpop.f32.mrb[0].mxu0
      %v433 = vadd.f32 0.0, %v432
      %v434 = vpop.f32.mrb[0].mxu0
      %435 = vmatprep.mubr.bf16.mxu0 0
      %436 = vmatmul.mubr.bf16.gmra.mrb[0].mxu0 %v387
      %v437 = vpop.f32.mrb[0].mxu0
      %v438 = vadd.f32 0.0, %v437
      %v439 = vpop.f32.mrb[0].mxu0
      %v440 = vpop.f32.mrb[0].mxu0
      %v441 = vadd.f32 0.0, %v440
      %v442 = vpop.f32.mrb[0].mxu0
      %443 = vmatprep.mubr.bf16.mxu0 0
      %444 = vmatmul.mubr.bf16.gmra.mrb[0].mxu0 %v390
      %v445 = vpop.f32.mrb[0].mxu0
      %v446 = vadd.f32 0.0, %v445
      %v447 = vpop.f32.mrb[0].mxu0
      %v448 = vpop.f32.mrb[0].mxu0
      %v449 = vadd.f32 0.0, %v448
      %v450 = vpop.f32.mrb[0].mxu0
      %451 = vmatprep.mubr.bf16.mxu0 0
      %452 = vmatmul.mubr.bf16.gmra.mrb[0].mxu0 %v393
      %v453 = vpop.f32.mrb[0].mxu0
      %v454 = vadd.f32 0.0, %v453
      %v455 = vpop.f32.mrb[0].mxu0
      %v456 = vpop.f32.mrb[0].mxu0
      %v457 = vadd.f32 0.0, %v456
      %v458 = vpop.f32.mrb[0].mxu0
      %459 = vdwg.mxu0
      %s460 = scalar_lea.vmem %s309, 32
      %v461 = vld [vmem:[%s460] sm:$0xf]
      %v462 = vld [vmem:[%s460 + $0x4] sm:$0xf]
      %v463 = vld [vmem:[%s460 + $0x8] sm:$0xf]
      %v464 = vld [vmem:[%s460 + $0xc] sm:$0xf]
      %v465 = vld [vmem:[%s460 + $0x10] sm:$0xf]
      %v466 = vld [vmem:[%s460 + $0x14] sm:$0xf]
      %v467 = vld [vmem:[%s460 + $0x18] sm:$0xf]
      %v468 = vld [vmem:[%s460 + $0x1c] sm:$0xf]
      %s469 = scalar_lea.vmem %s300, 32
      %v470 = vld [vmem:[%s469] sm:$0xf]
      %v471 = vld [vmem:[%s469 + $0x4] sm:$0xf]
      %v472 = vld [vmem:[%s469 + $0x8] sm:$0xf]
      %v473 = vld [vmem:[%s469 + $0xc] sm:$0xf]
      %v474 = vld [vmem:[%s469 + $0x10] sm:$0xf]
      %v475 = vld [vmem:[%s469 + $0x14] sm:$0xf]
      %v476 = vld [vmem:[%s469 + $0x18] sm:$0xf]
      %v477 = vld [vmem:[%s469 + $0x1c] sm:$0xf]
      %v486 = vunpack.c.l.b16 %v461
      %v487 = vunpack.c.l.b16 %v462
      %v488 = vunpack.c.l.b16 %v463
      %v489 = vunpack.c.l.b16 %v464
      %v490 = vunpack.c.l.b16 %v465
      %v491 = vunpack.c.l.b16 %v466
      %v492 = vunpack.c.l.b16 %v467
      %v493 = vunpack.c.l.b16 %v468
      %v494 = vpack.c.b16 %v487, %v486
      %v495 = vpack.c.b16 %v489, %v488
      %v496 = vpack.c.b16 %v491, %v490
      %v497 = vpack.c.b16 %v493, %v492
      %v506 = vunpack.c.l.b16 %v470
      %v507 = vunpack.c.l.b16 %v471
      %v508 = vunpack.c.l.b16 %v472
      %v509 = vunpack.c.l.b16 %v473
      %v510 = vunpack.c.l.b16 %v474
      %v511 = vunpack.c.l.b16 %v475
      %v512 = vunpack.c.l.b16 %v476
      %v513 = vunpack.c.l.b16 %v477
      %v514 = vpack.c.b16 %v507, %v506
      %v515 = vpack.c.b16 %v509, %v508
      %v516 = vpack.c.b16 %v511, %v510
      %v517 = vpack.c.b16 %v513, %v512
      %v523 = vsel %vm382, %v494, 0
      %v526 = vsel %vm382, %v495, 0
      %v529 = vsel %vm382, %v496, 0
      %v532 = vsel %vm382, %v497, 0
      %534 = vmatprep.subr.bf16.mxu0 0
      %535 = vmatpush1.bf16.msra.mxu0 %v514
      %536 = vmatprep.subr.bf16.mxu0 0
      %537 = vmatpush1.bf16.msra.mxu0 %v515
      %538 = vmatprep.subr.bf16.mxu0 0
      %539 = vmatpush1.bf16.msra.mxu0 %v516
      %540 = vmatprep.subr.bf16.mxu0 0
      %541 = vmatpush1.bf16.msra.mxu0 %v517
      %542 = vmatprep.subr.bf16.mxu0 0
      %543 = vmatpush1.bf16.msra.mxu0 0
      %544 = vmatprep.subr.bf16.mxu0 0
      %545 = vmatpush1.bf16.msra.mxu0 0
      %546 = vmatprep.subr.bf16.mxu0 0
      %547 = vmatpush1.bf16.msra.mxu0 0
      %548 = vmatprep.subr.bf16.mxu0 0
      %549 = vmatpush1.bf16.msra.mxu0 0
      %550 = vmatprep.subr.bf16.mxu0 0
      %551 = vmatpush1.bf16.msra.mxu0 0
      %552 = vmatprep.subr.bf16.mxu0 0
      %553 = vmatpush1.bf16.msra.mxu0 0
      %554 = vmatprep.subr.bf16.mxu0 0
      %555 = vmatpush1.bf16.msra.mxu0 0
      %556 = vmatprep.subr.bf16.mxu0 0
      %557 = vmatpush1.bf16.msra.mxu0 0
      %558 = vmatprep.subr.bf16.mxu0 0
      %559 = vmatpush1.bf16.msra.mxu0 0
      %560 = vmatprep.subr.bf16.mxu0 0
      %561 = vmatpush1.bf16.msra.mxu0 0
      %562 = vmatprep.subr.bf16.mxu0 0
      %563 = vmatpush1.bf16.msra.mxu0 0
      %564 = vmatprep.subr.bf16.mxu0 0
      %565 = vmatpush1.bf16.msra.mxu0 0
      %566 = vmatprep.mubr.bf16.mxu0 0
      %567 = vmatmul.mubr.bf16.gmra.mrb[0].mxu0 %v523
      %v568 = vpop.f32.mrb[0].mxu0
      %v569 = vadd.f32 0.0, %v568
      %v570 = vpop.f32.mrb[0].mxu0
      %v571 = vpop.f32.mrb[0].mxu0
      %v572 = vadd.f32 0.0, %v571
      %v573 = vpop.f32.mrb[0].mxu0
      %574 = vmatprep.mubr.bf16.mxu0 0
      %575 = vmatmul.mubr.bf16.gmra.mrb[0].mxu0 %v526
      %v576 = vpop.f32.mrb[0].mxu0
      %v577 = vadd.f32 0.0, %v576
      %v578 = vpop.f32.mrb[0].mxu0
      %v579 = vpop.f32.mrb[0].mxu0
      %v580 = vadd.f32 0.0, %v579
      %v581 = vpop.f32.mrb[0].mxu0
      %582 = vmatprep.mubr.bf16.mxu0 0
      %583 = vmatmul.mubr.bf16.gmra.mrb[0].mxu0 %v529
      %v584 = vpop.f32.mrb[0].mxu0
      %v585 = vadd.f32 0.0, %v584
      %v586 = vpop.f32.mrb[0].mxu0
      %v587 = vpop.f32.mrb[0].mxu0
      %v588 = vadd.f32 0.0, %v587
      %v589 = vpop.f32.mrb[0].mxu0
      %590 = vmatprep.mubr.bf16.mxu0 0
      %591 = vmatmul.mubr.bf16.gmra.mrb[0].mxu0 %v532
      %v592 = vpop.f32.mrb[0].mxu0
      %v593 = vadd.f32 0.0, %v592
      %v594 = vpop.f32.mrb[0].mxu0
      %v595 = vpop.f32.mrb[0].mxu0
      %v596 = vadd.f32 0.0, %v595
      %v597 = vpop.f32.mrb[0].mxu0
      %598 = vdwg.mxu0
      %607 = vrot.lane.b32.xlu0 %v569, 32
      %v608 = vpop.permute.xlu0 %607
      %609 = vrot.lane.b32.xlu0 %v572, 32
      %v610 = vpop.permute.xlu0 %609
      %611 = vrot.lane.b32.xlu0 %v577, 32
      %v612 = vpop.permute.xlu0 %611
      %613 = vrot.lane.b32.xlu0 %v580, 32
      %v614 = vpop.permute.xlu0 %613
      %615 = vrot.lane.b32.xlu0 %v585, 32
      %v616 = vpop.permute.xlu0 %615
      %617 = vrot.lane.b32.xlu0 %v588, 32
      %v618 = vpop.permute.xlu0 %617
      %619 = vrot.lane.b32.xlu0 %v593, 32
      %v620 = vpop.permute.xlu0 %619
      %621 = vrot.lane.b32.xlu0 %v596, 32
      %v622 = vpop.permute.xlu0 %621
      %vm631 = vcmask 261120
      %v632 = vsel %vm631, %v430, %v608
      %v633 = vsel %vm631, %v433, %v610
      %v634 = vsel %vm631, %v438, %v612
      %v635 = vsel %vm631, %v441, %v614
      %v636 = vsel %vm631, %v446, %v616
      %v637 = vsel %vm631, %v449, %v618
      %v638 = vsel %vm631, %v454, %v620
      %v639 = vsel %vm631, %v457, %v622
      %v640 = vpack.c.bf16 %v633, %v632
      %v641 = vpack.c.bf16 %v635, %v634
      %v642 = vpack.c.bf16 %v637, %v636
      %v643 = vpack.c.bf16 %v639, %v638
      %v644 = vld [vmem:[%s4] sm:$0xf]
      %v645 = vld [vmem:[%s4 + $0x4] sm:$0xf]
      %v646 = vld [vmem:[%s4 + $0x8] sm:$0xf]
      %v647 = vld [vmem:[%s4 + $0xc] sm:$0xf]
      %v648 = vld [vmem:[%s4 + $0x10] sm:$0xf]
      %v649 = vld [vmem:[%s4 + $0x14] sm:$0xf]
      %v650 = vld [vmem:[%s4 + $0x18] sm:$0xf]
      %v651 = vld [vmem:[%s4 + $0x1c] sm:$0xf]
      %v660 = vunpack.c.l.b16 %v644
      %v661 = vunpack.c.l.b16 %v645
      %v662 = vunpack.c.l.b16 %v646
      %v663 = vunpack.c.l.b16 %v647
      %v664 = vunpack.c.l.b16 %v648
      %v665 = vunpack.c.l.b16 %v649
      %v666 = vunpack.c.l.b16 %v650
      %v667 = vunpack.c.l.b16 %v651
      %v668 = vpack.c.b16 %v661, %v660
      %v669 = vpack.c.b16 %v663, %v662
      %v670 = vpack.c.b16 %v665, %v664
      %v671 = vpack.c.b16 %v667, %v666
      %v677 = vsel %vm382, %v640, 0
      %v680 = vsel %vm382, %v641, 0
      %v683 = vsel %vm382, %v642, 0
      %v686 = vsel %vm382, %v643, 0
      %688 = vmatprep.subr.bf16.mxu0 0
      %689 = vmatpush1.bf16.msra.mxu0 %v668
      %690 = vmatprep.subr.bf16.mxu0 0
      %691 = vmatpush1.bf16.msra.mxu0 %v669
      %692 = vmatprep.subr.bf16.mxu0 0
      %693 = vmatpush1.bf16.msra.mxu0 %v670
      %694 = vmatprep.subr.bf16.mxu0 0
      %695 = vmatpush1.bf16.msra.mxu0 %v671
      %696 = vmatprep.subr.bf16.mxu0 0
      %697 = vmatpush1.bf16.msra.mxu0 0
      %698 = vmatprep.subr.bf16.mxu0 0
      %699 = vmatpush1.bf16.msra.mxu0 0
      %700 = vmatprep.subr.bf16.mxu0 0
      %701 = vmatpush1.bf16.msra.mxu0 0
      %702 = vmatprep.subr.bf16.mxu0 0
      %703 = vmatpush1.bf16.msra.mxu0 0
      %704 = vmatprep.subr.bf16.mxu0 0
      %705 = vmatpush1.bf16.msra.mxu0 0
      %706 = vmatprep.subr.bf16.mxu0 0
      %707 = vmatpush1.bf16.msra.mxu0 0
      %708 = vmatprep.subr.bf16.mxu0 0
      %709 = vmatpush1.bf16.msra.mxu0 0
      %710 = vmatprep.subr.bf16.mxu0 0
      %711 = vmatpush1.bf16.msra.mxu0 0
      %712 = vmatprep.subr.bf16.mxu0 0
      %713 = vmatpush1.bf16.msra.mxu0 0
      %714 = vmatprep.subr.bf16.mxu0 0
      %715 = vmatpush1.bf16.msra.mxu0 0
      %716 = vmatprep.subr.bf16.mxu0 0
      %717 = vmatpush1.bf16.msra.mxu0 0
      %718 = vmatprep.subr.bf16.mxu0 0
      %719 = vmatpush1.bf16.msra.mxu0 0
      %720 = vmatprep.mubr.bf16.mxu0 0
      %721 = vmatmul.mubr.bf16.gmra.mrb[0].mxu0 %v677
      %v722 = vpop.f32.mrb[0].mxu0
      %v723 = vadd.f32 0.0, %v722
      %v724 = vpop.f32.mrb[0].mxu0
      %v725 = vpop.f32.mrb[0].mxu0
      %v726 = vadd.f32 0.0, %v725
      %v727 = vpop.f32.mrb[0].mxu0
      %728 = vmatprep.mubr.bf16.mxu0 0
      %729 = vmatmul.mubr.bf16.gmra.mrb[0].mxu0 %v680
      %v730 = vpop.f32.mrb[0].mxu0
      %v731 = vadd.f32 0.0, %v730
      %v732 = vpop.f32.mrb[0].mxu0
      %v733 = vpop.f32.mrb[0].mxu0
      %v734 = vadd.f32 0.0, %v733
      %v735 = vpop.f32.mrb[0].mxu0
      %736 = vmatprep.mubr.bf16.mxu0 0
      %737 = vmatmul.mubr.bf16.gmra.mrb[0].mxu0 %v683
      %v738 = vpop.f32.mrb[0].mxu0
      %v739 = vadd.f32 0.0, %v738
      %v740 = vpop.f32.mrb[0].mxu0
      %v741 = vpop.f32.mrb[0].mxu0
      %v742 = vadd.f32 0.0, %v741
      %v743 = vpop.f32.mrb[0].mxu0
      %744 = vmatprep.mubr.bf16.mxu0 0
      %745 = vmatmul.mubr.bf16.gmra.mrb[0].mxu0 %v686
      %v746 = vpop.f32.mrb[0].mxu0
      %v747 = vadd.f32 0.0, %v746
      %v748 = vpop.f32.mrb[0].mxu0
      %v749 = vpop.f32.mrb[0].mxu0
      %v750 = vadd.f32 0.0, %v749
      %v751 = vpop.f32.mrb[0].mxu0
      %752 = vdwg.mxu0
      %v753 = vld [vmem:[%s294] sm:$0xff]
      %v754 = vld [vmem:[%s294 + $0x8] sm:$0xff]
      %v755 = vld [vmem:[%s294 + $0x10] sm:$0xff]
      %v756 = vld [vmem:[%s294 + $0x18] sm:$0xff]
      %v757 = vld [vmem:[%s294 + $0x20] sm:$0xff]
      %v758 = vld [vmem:[%s294 + $0x28] sm:$0xff]
      %v759 = vld [vmem:[%s294 + $0x30] sm:$0xff]
      %v760 = vld [vmem:[%s294 + $0x38] sm:$0xff]
      %s761 = sld [smem:[#allocation2]]
      %v762 = vstv %s761
      %v763 = vmul.f32 %v762, %v723
      %v764 = vmul.f32 %v762, %v726
      %v765 = vmul.f32 %v762, %v731
      %v766 = vmul.f32 %v762, %v734
      %v767 = vmul.f32 %v762, %v739
      %v768 = vmul.f32 %v762, %v742
      %v769 = vmul.f32 %v762, %v747
      %v770 = vmul.f32 %v762, %v750
      %v771 = vadd.f32 %v753, %v763
      %v772 = vadd.f32 %v754, %v764
      %v773 = vadd.f32 %v755, %v765
      %v774 = vadd.f32 %v756, %v766
      %v775 = vadd.f32 %v757, %v767
      %v776 = vadd.f32 %v758, %v768
      %v777 = vadd.f32 %v759, %v769
      %v778 = vadd.f32 %v760, %v770
      %vm779 = vcmask 130048
      %780 = vst.msk [vmem:[%s319] sm:$0xff] %vm779, %v771
      %781 = vst.msk [vmem:[%s319 + $0x8] sm:$0xff] %vm779, %v772
      %782 = vst.msk [vmem:[%s319 + $0x10] sm:$0xff] %vm779, %v773
      %783 = vst.msk [vmem:[%s319 + $0x18] sm:$0xff] %vm779, %v774
      %784 = vst.msk [vmem:[%s319 + $0x20] sm:$0xff] %vm779, %v775
      %785 = vst.msk [vmem:[%s319 + $0x28] sm:$0xff] %vm779, %v776
      %786 = vst.msk [vmem:[%s319 + $0x30] sm:$0xff] %vm779, %v777
      %787 = vst.msk [vmem:[%s319 + $0x38] sm:$0xff] %vm779, %v778
      %s788 = smul.u32 8, %s22
      %p789 = scmp.lt.s32.totalorder %s21, 1
      %s790 = scalar_select %p789, %s21, 1
      %p791 = scmp.lt.s32.totalorder %s788, 7
      %s792 = scalar_select %p791, %s788, 7
      %s793 = smul.addr %s790, 8
      %s794 = sadd.s32 %s792, %s793
      %s795 = smul.addr %s794, 8
      %s796 = scalar_lea.vmem %s5, %s795
      // Predicated region
      $region41: #{tpu_custom_call.1} parent=39 // pred_check
        %p797 = pneg %p173
      $region42: #{tpu_custom_call.1} parent=39 // pred_check_branch
        %799 = sbr.rel (%p797) target = $region44
      $region43: #{tpu_custom_call.1} parent=39 // pred_region
        %s800 = smul.u32 8, %s22
      $region44: #{tpu_custom_call.1} parent=39 // pred_fallthru
        _
    $region40: #{tpu_custom_call.1} parent=5 // pred_fallthru
      _
    %p801 = scmp.le.s32.totalorder 2, %s12
    // Predicated region
    $region45: #{tpu_custom_call.1} parent=5 // pred_check
      %p802 = pneg %p801
    $region46: #{tpu_custom_call.1} parent=5 // pred_check_branch
      %804 = sbr.rel (%p802) target = $region48
    $region47: #{tpu_custom_call.1} parent=5 // pred_region
      %s805 = ssub.s32 %s12, 2
      // Predicated region
      $region49: #{tpu_custom_call.1} parent=47 // pred_check
        %p806 = pneg %p179
      $region50: #{tpu_custom_call.1} parent=47 // pred_check_branch
        %808 = sbr.rel (%p806) target = $region52
      $region51: #{tpu_custom_call.1} parent=47 // pred_region
        %s809 = smul.u32 8, %s24
        %p810 = scmp.lt.s32.totalorder %s23, 1
        %s811 = scalar_select %p810, %s23, 1
        %p812 = scmp.lt.s32.totalorder %s809, 7
        %s813 = scalar_select %p812, %s809, 7
        %s814 = smul.addr %s811, 8
        %s815 = sadd.s32 %s813, %s814
        %s816 = smul.addr %s815, 8
        %s817 = scalar_lea.vmem %s5, %s816
      $region52: #{tpu_custom_call.1} parent=47 // pred_fallthru
        _
    $region48: #{tpu_custom_call.1} parent=5 // pred_fallthru
      _
  $region6: #{tpu_custom_call.1} parent=0 // loop_footer
    %s16 = sadd.s32 1, %s12
  $region7: #{tpu_custom_call.1} parent=0 // loop_footer_branch
    %11 = sbr.rel target = $region3
  $region8: #{tpu_custom_call.1} parent=0 // loop_exit
    _

</llo_original>
